<compile_context>
chip_gen: v7x
topology: tpu7x:2x2x1
jax: 0.10.0
libtpu: 0.0.40
codegen_flags: <defaults>
</compile_context>

<pallas_src>
import jax
import jax.numpy as jnp
import numpy as np
from jax import lax
from jax.experimental import pallas as pl
from jax.experimental.pallas import tpu as pltpu

NEG_INF = -1e30


def _round_up(x, m):
    return ((x + m - 1) // m) * m


def _cdiv(a, b):
    return -(-a // b)


def tagger_kernel(tokens_ref, p_ref, vocab_ref, bias_ref, out_ref):
    tokens = tokens_ref[...]            # (TILE_T, Ep) f32, E zero-padded
    p = p_ref[...]                      # (Vp, Ep) bf16 folded (vocab_ext @ W.T)
    vocab_c = vocab_ref[...]            # (Vp, Ep) bf16; default & pad rows are zero
    bias = bias_ref[...]                # (1, Vp)  f32; 0 valid cols, -1e30 padded cols

    # logits = tokens @ P.T  -- bf16 MXU operands, f32 accumulation, no transpose.
    logits = lax.dot_general(
        tokens.astype(jnp.bfloat16), p,
        dimension_numbers=(((1,), (1,)), ((), ())),
        preferred_element_type=jnp.float32,
    ) + bias                                                       # (TILE_T, Vp) f32

    # Softmax over the (V+1) valid columns (column 0 == default embedding).
    m = jnp.max(logits, axis=-1, keepdims=True)
    e = jnp.exp(logits - m)
    denom = jnp.sum(e, axis=-1, keepdims=True)
    sim = e / denom                                                # exact normalization

    # similarity for the default-embedding column == column 0 (leading lane slice).
    sim_d = sim[:, :1]                                             # (TILE_T, 1)

    # concept_based = sim_default * tokens + sim[:, 1:V+1] @ vocab
    # (row 0 and rows > V of vocab_c are zero, so the full sim @ vocab_c is exact.)
    out_ref[...] = sim_d * tokens + jnp.dot(
        sim.astype(jnp.bfloat16), vocab_c, preferred_element_type=jnp.float32
    )


def tagger_forward(tokens, weight, vocab, default_emb, *, tile_t=1024):
    """tokens (T,E), weight (E,E), vocab (V,E), default_emb (E,) -> (T,E)."""
    tokens = jnp.asarray(tokens, jnp.float32)
    weight = jnp.asarray(weight, jnp.float32)
    vocab = jnp.asarray(vocab, jnp.float32)
    default_emb = jnp.asarray(default_emb, jnp.float32).reshape(1, -1)

    T, E = tokens.shape
    V = vocab.shape[0]

    Ep = _round_up(E, 128)               # lane-dense embedding dim
    Vp = _round_up(V + 1, 128)           # lane-dense logits / sim

    # ---- Tile selection ----------------------------------------------------
    # Streamed per-row bytes: tokens + out, f32, double-buffered.
    bytes_per_row = 2 * 2 * Ep * 4
    budget = 24 * 1024 * 1024            # streamed-buffer budget (headroom on v7x 64 MiB)
    tile_cap = max(8, (budget // bytes_per_row) // 8 * 8)
    tile_t = max(8, min(tile_t, tile_cap))
    n_steps = max(1, _cdiv(T, tile_t))
    if n_steps < 2 and T > 8:
        n_steps = 2                      # >=2 grid steps so v7x's 2nd TensorCore works
    TILE_T = _round_up(_cdiv(T, n_steps), 8)
    T_pad = _round_up(T, TILE_T)

    # ---- One-time parameter fold (default embedding placed at row 0) -------
    vocab_ext = jnp.concatenate([default_emb, vocab], axis=0)      # (V+1, E)
    p_folded = vocab_ext @ weight.T                                # (V+1, E) f32
    p_p = (jnp.zeros((Vp, Ep), jnp.bfloat16)
           .at[:V + 1, :E].set(p_folded.astype(jnp.bfloat16)))
    vocab_p = (jnp.zeros((Vp, Ep), jnp.bfloat16)
               .at[1:V + 1, :E].set(vocab.astype(jnp.bfloat16)))
    bias = jnp.where(jnp.arange(Vp) <= V, 0.0, NEG_INF).astype(jnp.float32)
    bias = bias.reshape(1, Vp)

    # Tokens: skip the pad copy entirely when already aligned.
    aligned = (T_pad == T) and (Ep == E)
    if aligned:
        tokens_p = tokens
    else:
        tokens_p = jnp.zeros((T_pad, Ep), jnp.float32).at[:T, :E].set(tokens)

    # ---- VMEM limit & cost estimate ----------------------------------------
    vmem_bytes = (
        2 * 2 * TILE_T * Ep * 4          # streamed tokens + out, double-buffered, f32
        + 2 * 2 * Vp * Ep * 2            # two resident bf16 (Vp, Ep), double-buffered
        + 2 * Vp * 4                     # bias
    )
    vmem_limit = int(min(max(2 * vmem_bytes, 16 * 1024 * 1024), 48 * 1024 * 1024))

    cost = pl.CostEstimate(
        flops=2 * 2 * T_pad * Vp * Ep,           # logits + combine matmuls
        transcendentals=T_pad * Vp,              # exp
        bytes_accessed=2 * T_pad * Ep * 4 + 2 * Vp * Ep * 2 + Vp * 4,
    )

    grid = (T_pad // TILE_T,)
    out = pl.pallas_call(
        tagger_kernel,
        out_shape=jax.ShapeDtypeStruct((T_pad, Ep), jnp.float32),
        grid_spec=pltpu.PrefetchScalarGridSpec(
            num_scalar_prefetch=0,
            grid=grid,
            in_specs=[
                pl.BlockSpec((TILE_T, Ep), lambda i: (i, 0)),   # streamed tokens (f32)
                pl.BlockSpec((Vp, Ep), lambda i: (0, 0)),       # resident folded vocab (bf16)
                pl.BlockSpec((Vp, Ep), lambda i: (0, 0)),       # resident vocab, combine (bf16)
                pl.BlockSpec((1, Vp), lambda i: (0, 0)),        # resident softmax mask bias
            ],
            out_specs=pl.BlockSpec((TILE_T, Ep), lambda i: (i, 0)),
        ),
        compiler_params=pltpu.CompilerParams(
            dimension_semantics=("parallel",),
            vmem_limit_bytes=vmem_limit,
        ),
        cost_estimate=cost,
    )(tokens_p, p_p, vocab_p, bias)

    if aligned:
        return out
    return out[:T, :E]


# ---- References -------------------------------------------------------------
def tagger_reference_f32(tokens, weight, vocab, default_emb):
    """Straight f32 transcription of the PyTorch forward."""
    vocab_ext = jnp.vstack((vocab, default_emb.reshape(1, -1)))    # (V+1, E)
    logits = tokens @ weight @ vocab_ext.T                         # (T, V+1)
    sim = jax.nn.softmax(logits, axis=1)
    return sim[:, -1:] * tokens + sim[:, :-1] @ vocab


def tagger_reference_matched(tokens, weight, vocab, default_emb):
    """Same math with the kernel's precision: bf16 MXU operands, f32 accumulation."""
    vocab_ext = jnp.vstack((vocab, default_emb.reshape(1, -1)))    # (V+1, E)
    p = (vocab_ext @ weight.T).astype(jnp.bfloat16)
    logits = lax.dot_general(
        tokens.astype(jnp.bfloat16), p,
        dimension_numbers=(((1,), (1,)), ((), ())),
        preferred_element_type=jnp.float32,
    )
    sim = jax.nn.softmax(logits, axis=1)
    combine = lax.dot_general(
        sim[:, :-1].astype(jnp.bfloat16), vocab.astype(jnp.bfloat16),
        dimension_numbers=(((1,), (0,)), ((), ())),
        preferred_element_type=jnp.float32,
    )
    return sim[:, -1:] * tokens + combine


def _check(out, tokens, weight, vocab, default_emb):
    out = np.asarray(out)
    ref_m = np.asarray(tagger_reference_matched(tokens, weight, vocab, default_emb))
    ref_f = np.asarray(tagger_reference_f32(tokens, weight, vocab, default_emb))
    # Primary check: matched-precision reference (catches any logic error).
    np.testing.assert_allclose(out, ref_m, rtol=2e-2, atol=2e-2)
    # Sanity check vs. full-f32 reference; slack is the bf16 MXU operand precision.
    rel = np.max(np.abs(out - ref_f)) / (np.max(np.abs(ref_f)) + 1e-6)
    assert rel < 0.1, f"bf16-vs-f32 normalized max error too large: {rel}"


if __name__ == "__main__":
    key = jax.random.PRNGKey(0)

    # --- Test 1: module-like init (weight = eye), E=32, V=8, T=20 packed tokens.
    E, V, T = 32, 8, 20
    k_def, k_vocab, k_tok, k_w2, k_def2, k_vocab2, k_tok2 = jax.random.split(key, 7)
    default_emb = jax.random.uniform(k_def, (E,), dtype=jnp.float32)
    weight = jnp.eye(E, dtype=jnp.float32)
    vocab = jax.random.normal(k_vocab, (V, E), dtype=jnp.float32)
    tokens = jax.random.normal(k_tok, (T, E), dtype=jnp.float32)
    # TODO(synk): PackedSequence metadata (batch_sizes, sorted_indices) is pure
    # pass-through in the module and is not modeled here.

    out = jax.block_until_ready(tagger_forward(tokens, weight, vocab, default_emb))
    _check(out, tokens, weight, vocab, default_emb)

    # Force a finer T tiling to exercise a 3-step pipelined grid + padding path.
    out_tiled = jax.block_until_ready(
        tagger_forward(tokens, weight, vocab, default_emb, tile_t=8))
    _check(out_tiled, tokens, weight, vocab, default_emb)

    # --- Test 2: aligned shapes (E=128 -> no pad/slice path), random weight.
    E2, V2, T2 = 128, 5, 32
    default_emb2 = jax.random.uniform(k_def2, (E2,), dtype=jnp.float32)
    weight2 = jax.random.normal(k_w2, (E2, E2), dtype=jnp.float32) * 0.1 + jnp.eye(E2)
    vocab2 = jax.random.normal(k_vocab2, (V2, E2), dtype=jnp.float32)
    tokens2 = jax.random.normal(k_tok2, (T2, E2), dtype=jnp.float32)

    out2 = jax.block_until_ready(tagger_forward(tokens2, weight2, vocab2, default_emb2))
    _check(out2, tokens2, weight2, vocab2, default_emb2)

    print("KERNEL_OK")
</pallas_src>

<mosaic_0001>
module attributes {stable_mosaic.version = 11 : i64} {
  func.func @tagger_kernel(%arg0: i32, %arg1: memref<16x128xf32, #tpu.memory_space<vmem>>, %arg2: memref<128x128xbf16, #tpu.memory_space<vmem>>, %arg3: memref<128x128xbf16, #tpu.memory_space<vmem>>, %arg4: memref<1x128xf32, #tpu.memory_space<vmem>>, %arg5: memref<16x128xf32, #tpu.memory_space<vmem>>) attributes {dimension_semantics = [#tpu.dimension_semantics<parallel>], iteration_bounds = array<i64: 2>, scalar_prefetch = 0 : i64, scratch_operands = 0 : i64, tpu.core_type = #tpu.core_type<tc>, window_params = [{transform_indices = @transform_0, window_bounds = array<i64: 16, 128>}, {pipeline_mode = #tpu.pipeline_mode<synchronous>, transform_indices = @transform_1, window_bounds = array<i64: 128, 128>}, {pipeline_mode = #tpu.pipeline_mode<synchronous>, transform_indices = @transform_2, window_bounds = array<i64: 128, 128>}, {pipeline_mode = #tpu.pipeline_mode<synchronous>, transform_indices = @transform_3, window_bounds = array<i64: 1, 128>}, {transform_indices = @transform_4, window_bounds = array<i64: 16, 128>}]} {
    %c0 = arith.constant 0 : index
    %c0_0 = arith.constant 0 : index
    %0 = vector.load %arg1[%c0, %c0_0] : memref<16x128xf32, #tpu.memory_space<vmem>>, vector<16x128xf32>
    %c0_1 = arith.constant 0 : index
    %c0_2 = arith.constant 0 : index
    %1 = vector.load %arg2[%c0_1, %c0_2] : memref<128x128xbf16, #tpu.memory_space<vmem>>, vector<128x128xbf16>
    %c0_3 = arith.constant 0 : index
    %c0_4 = arith.constant 0 : index
    %2 = vector.load %arg3[%c0_3, %c0_4] : memref<128x128xbf16, #tpu.memory_space<vmem>>, vector<128x128xbf16>
    %c0_5 = arith.constant 0 : index
    %c0_6 = arith.constant 0 : index
    %3 = vector.load %arg4[%c0_5, %c0_6] : memref<1x128xf32, #tpu.memory_space<vmem>>, vector<1x128xf32>
    %4 = arith.truncf %0 : vector<16x128xf32> to vector<16x128xbf16>
    %cst = arith.constant dense<0.000000e+00> : vector<16x128xf32>
    %5 = tpu.matmul %4, %1, %cst {dimension_numbers = #tpu.dot_dimension_numbers<[1], [1], [0], [0], [0, 0, 1, 0], [], []>} : vector<16x128xbf16>, vector<128x128xbf16>, vector<16x128xf32> -> vector<16x128xf32>
    %6 = vector.broadcast %3 : vector<1x128xf32> to vector<16x128xf32>
    %7 = arith.addf %5, %6 : vector<16x128xf32>
    %cst_7 = arith.constant dense<0xFF800000> : vector<16xf32>
    %8 = vector.multi_reduction <maximumf>, %7, %cst_7 [1] : vector<16x128xf32> to vector<16xf32>
    %9 = vector.shape_cast %8 : vector<16xf32> to vector<16x1xf32>
    %10 = vector.broadcast %9 : vector<16x1xf32> to vector<16x128xf32>
    %11 = arith.subf %7, %10 : vector<16x128xf32>
    %12 = math.exp %11 : vector<16x128xf32>
    %cst_8 = arith.constant dense<0.000000e+00> : vector<16xf32>
    %13 = vector.multi_reduction <add>, %12, %cst_8 [1] : vector<16x128xf32> to vector<16xf32>
    %14 = vector.shape_cast %13 : vector<16xf32> to vector<16x1xf32>
    %15 = vector.broadcast %14 : vector<16x1xf32> to vector<16x128xf32>
    %16 = arith.divf %12, %15 : vector<16x128xf32>
    %17 = vector.extract_strided_slice %16 {offsets = [0, 0], sizes = [16, 1], strides = [1, 1]} : vector<16x128xf32> to vector<16x1xf32>
    %18 = vector.broadcast %17 : vector<16x1xf32> to vector<16x128xf32>
    %19 = arith.mulf %18, %0 : vector<16x128xf32>
    %20 = arith.truncf %16 : vector<16x128xf32> to vector<16x128xbf16>
    %cst_9 = arith.constant dense<0.000000e+00> : vector<16x128xf32>
    %21 = tpu.matmul %20, %2, %cst_9 {dimension_numbers = #tpu.dot_dimension_numbers<[1], [0], [0], [1], [0, 0, 1, 1], [], []>} : vector<16x128xbf16>, vector<128x128xbf16>, vector<16x128xf32> -> vector<16x128xf32>
    %22 = arith.addf %19, %21 : vector<16x128xf32>
    %c0_10 = arith.constant 0 : index
    %c0_11 = arith.constant 0 : index
    %23 = vector.load %arg5[%c0_10, %c0_11] : memref<16x128xf32, #tpu.memory_space<vmem>>, vector<16x128xf32>
    tpu.vector_store %arg5[%c0_10, %c0_11], %22 {strides = array<i32>} : memref<16x128xf32, #tpu.memory_space<vmem>>, vector<16x128xf32>,
    return
  }
  func.func @transform_0(%arg0: i32) -> (i32, i32) {
    %c0_i32 = arith.constant 0 : i32
    %c0_i32_0 = arith.constant 0 : i32
    return %arg0, %c0_i32 : i32, i32
  }
  func.func @transform_1(%arg0: i32) -> (i32, i32) {
    %c0_i32 = arith.constant 0 : i32
    %c0_i32_0 = arith.constant 0 : i32
    %c0_i32_1 = arith.constant 0 : i32
    return %c0_i32, %c0_i32_0 : i32, i32
  }
  func.func @transform_2(%arg0: i32) -> (i32, i32) {
    %c0_i32 = arith.constant 0 : i32
    %c0_i32_0 = arith.constant 0 : i32
    %c0_i32_1 = arith.constant 0 : i32
    return %c0_i32, %c0_i32_0 : i32, i32
  }
  func.func @transform_3(%arg0: i32) -> (i32, i32) {
    %c0_i32 = arith.constant 0 : i32
    %c0_i32_0 = arith.constant 0 : i32
    %c0_i32_1 = arith.constant 0 : i32
    return %c0_i32, %c0_i32_0 : i32, i32
  }
  func.func @transform_4(%arg0: i32) -> (i32, i32) {
    %c0_i32 = arith.constant 0 : i32
    %c0_i32_0 = arith.constant 0 : i32
    return %arg0, %c0_i32 : i32, i32
  }
}

</mosaic_0001>

<llo_original>
// kernel: tpu_custom_call.1
$region0: #{tpu_custom_call.1}
  #allocation0 [shape = 'u32[]', space=smem, size = 0x4, offset = 0x4, fixed_abs, tag = 'smem constant byte address 0x4 - core index']
  #allocation1 [shape = 'u32[144,128]{1,0:T(1,128)}', space=vmem, size = 0x12000, scoped, tag = 'internal scratch']
  %s0 = inlined_call_operand.hbm [shape: f32[32,128], index: 0, kind: input, shape index: {}]
  %s1 = inlined_call_operand.hbm [shape: bf16[128,128], index: 1, kind: input, shape index: {}]
  %s2 = inlined_call_operand.hbm [shape: bf16[128,128], index: 2, kind: input, shape index: {}]
  %s3 = inlined_call_operand.vmem [shape: f32[1,128], index: 3, kind: input, shape index: {}]
  %s4 = inlined_call_operand.hbm [shape: f32[32,128], index: 4, kind: output, shape index: {}]
  %s5 = sld [smem:[#allocation0]]
  $region61: #{tpu_custom_call.1} parent=0
    _
  %s7 = ssub.s32 1, %s5
  %s8 = scalar_select 0, %s7, %s5
  $region1: #{tpu_custom_call.1} parent=0
    #allocation2 [shape = 'u8[16384]{0}', space=vmem, size = 0x4000, scoped, tag = 'input window, operand 0']
    #allocation3 [shape = 's32[2]{0}', space=sflag, size = 0x8, scoped, tag = 'scoped memory for tpu_custom_call.1']
    #allocation4 [shape = 's32[2]{0}', space=sflag, size = 0x8, scoped, tag = 'scoped memory for tpu_custom_call.1']
    #allocation5 [shape = 'u8[32768]{0}', space=vmem, size = 0x8000, scoped, tag = 'input window, operand 1, single buffered']
    #allocation6 [shape = 's32[1]{0}', space=sflag, size = 0x4, scoped, tag = 'scoped memory for tpu_custom_call.1']
    #allocation7 [shape = 'u8[32768]{0}', space=vmem, size = 0x8000, scoped, tag = 'input window, operand 2, single buffered']
    #allocation8 [shape = 'u8[16384]{0}', space=vmem, size = 0x4000, scoped, tag = 'output window, operand 0']
    %9 = vsyncpa [#allocation3], 0
    %s10 = scalar_lea.sflag [#allocation3], 1
    %11 = vsyncpa %s10, 0
    %12 = vsyncpa [#allocation6], 0
    %13 = vsyncpa [#allocation4], 0
    %s14 = scalar_lea.sflag [#allocation4], 1
    %15 = vsyncpa %s14, 0
    loop: start=0, step=1, limit=4
    $region2: #{tpu_custom_call.1} parent=1 // loop_pre_header
      _
    $region3: #{tpu_custom_call.1} parent=1 // loop_header
      %s17 = sphi 0, %s21
      %p18 = scmp.ge.s32.totalorder %s17, 4
      %s27 = sphi 0, %s29
      %s30 = sphi 0, %s27
      %s31 = sphi 0, %s30
      %s47 = sphi 0, %s31
      %s51 = sphi 0, %s51
      %s53 = sphi 0, %s51
      %s54 = sphi 0, %s53
      %s68 = sphi 0, %s54
      %s72 = sphi 0, %s72
      %s74 = sphi 0, %s72
      %s75 = sphi 0, %s74
      %s89 = sphi 0, %s75
      %s93 = sphi 0, %s93
      %s95 = sphi 0, %s93
      %s96 = sphi 0, %s95
      %s110 = sphi 0, %s96
      %s116 = sphi 0, %s118
      %s119 = sphi 0, %s116
      %s120 = sphi 0, %s119
      %s136 = sphi 0, %s120
    $region4: #{tpu_custom_call.1} parent=1 // loop_header_branch
      %20 = sbr.rel (%p18) target = $region8
    $region5: #{tpu_custom_call.1} parent=1 // loop_body
      %s22 = ssub.s32 %s17, 1
      %s23 = ssub.s32 %s17, 2
      %s24 = sadd.s32 %s17, 1
      %s25 = ssub.s32 %s17, %s24
      %p26 = scmp.eq.s32.totalorder %s25, 0
      %s28 = sadd.s32 %s27, 1
      %s29 = scalar_select %p26, %s27, %s28
      %p32 = pneg %p26
      %p33 = scmp.eq.s32.totalorder %s17, 1
      %p34 = por %p32, %p33
      %p35 = scmp.ne.s32.totalorder %s27, %s30
      %p36 = scmp.eq.s32.totalorder %s17, 0
      %p37 = por %p35, %p36
      %p38 = scmp.ne.s32.totalorder %s27, %s30
      %p39 = scmp.eq.s32.totalorder %s22, 1
      %p40 = por %p38, %p39
      %p41 = scmp.ne.s32.totalorder %s30, %s31
      %p42 = scmp.eq.s32.totalorder %s22, 0
      %p43 = por %p41, %p42
      %p44 = scmp.ne.s32.totalorder %s30, %s31
      %p45 = scmp.eq.s32.totalorder %s23, 1
      %p46 = por %p44, %p45
      %p48 = scmp.ne.s32.totalorder %s31, %s47
      %p49 = scmp.eq.s32.totalorder %s23, 0
      %p50 = por %p48, %p49
      %s52 = sadd.s32 %s51, 1
      %p55 = scmp.eq.s32.totalorder %s17, 1
      %p56 = scmp.ne.s32.totalorder %s51, %s53
      %p57 = scmp.eq.s32.totalorder %s17, 0
      %p58 = por %p56, %p57
      %p59 = scmp.ne.s32.totalorder %s51, %s53
      %p60 = scmp.eq.s32.totalorder %s22, 1
      %p61 = por %p59, %p60
      %p62 = scmp.ne.s32.totalorder %s53, %s54
      %p63 = scmp.eq.s32.totalorder %s22, 0
      %p64 = por %p62, %p63
      %p65 = scmp.ne.s32.totalorder %s53, %s54
      %p66 = scmp.eq.s32.totalorder %s23, 1
      %p67 = por %p65, %p66
      %p69 = scmp.ne.s32.totalorder %s54, %s68
      %p70 = scmp.eq.s32.totalorder %s23, 0
      %p71 = por %p69, %p70
      %s73 = sadd.s32 %s72, 1
      %p76 = scmp.eq.s32.totalorder %s17, 1
      %p77 = scmp.ne.s32.totalorder %s72, %s74
      %p78 = scmp.eq.s32.totalorder %s17, 0
      %p79 = por %p77, %p78
      %p80 = scmp.ne.s32.totalorder %s72, %s74
      %p81 = scmp.eq.s32.totalorder %s22, 1
      %p82 = por %p80, %p81
      %p83 = scmp.ne.s32.totalorder %s74, %s75
      %p84 = scmp.eq.s32.totalorder %s22, 0
      %p85 = por %p83, %p84
      %p86 = scmp.ne.s32.totalorder %s74, %s75
      %p87 = scmp.eq.s32.totalorder %s23, 1
      %p88 = por %p86, %p87
      %p90 = scmp.ne.s32.totalorder %s75, %s89
      %p91 = scmp.eq.s32.totalorder %s23, 0
      %p92 = por %p90, %p91
      %s94 = sadd.s32 %s93, 1
      %p97 = scmp.eq.s32.totalorder %s17, 1
      %p98 = scmp.ne.s32.totalorder %s93, %s95
      %p99 = scmp.eq.s32.totalorder %s17, 0
      %p100 = por %p98, %p99
      %p101 = scmp.ne.s32.totalorder %s93, %s95
      %p102 = scmp.eq.s32.totalorder %s22, 1
      %p103 = por %p101, %p102
      %p104 = scmp.ne.s32.totalorder %s95, %s96
      %p105 = scmp.eq.s32.totalorder %s22, 0
      %p106 = por %p104, %p105
      %p107 = scmp.ne.s32.totalorder %s95, %s96
      %p108 = scmp.eq.s32.totalorder %s23, 1
      %p109 = por %p107, %p108
      %p111 = scmp.ne.s32.totalorder %s96, %s110
      %p112 = scmp.eq.s32.totalorder %s23, 0
      %p113 = por %p111, %p112
      %s114 = ssub.s32 %s17, %s24
      %p115 = scmp.eq.s32.totalorder %s114, 0
      %s117 = sadd.s32 %s116, 1
      %s118 = scalar_select %p115, %s116, %s117
      %p121 = pneg %p115
      %p122 = scmp.eq.s32.totalorder %s17, 1
      %p123 = por %p121, %p122
      %p124 = scmp.ne.s32.totalorder %s116, %s119
      %p125 = scmp.eq.s32.totalorder %s17, 0
      %p126 = por %p124, %p125
      %p127 = scmp.ne.s32.totalorder %s116, %s119
      %p128 = scmp.eq.s32.totalorder %s22, 1
      %p129 = por %p127, %p128
      %p130 = scmp.ne.s32.totalorder %s119, %s120
      %p131 = scmp.eq.s32.totalorder %s22, 0
      %p132 = por %p130, %p131
      %p133 = scmp.ne.s32.totalorder %s119, %s120
      %p134 = scmp.eq.s32.totalorder %s23, 1
      %p135 = por %p133, %p134
      %p137 = scmp.ne.s32.totalorder %s120, %s136
      %p138 = scmp.eq.s32.totalorder %s23, 0
      %p139 = por %p137, %p138
      %p140 = scmp.le.s32.totalorder 1, %s17
      %p141 = scmp.lt.s32.totalorder %s17, 3
      %p142 = pnand %p140, %p141
      %p143 = pneg %p142
      // Predicated region
      $region9: #{tpu_custom_call.1} parent=5 // pred_check
        _
      $region10: #{tpu_custom_call.1} parent=5 // pred_check_branch
        %145 = sbr.rel (%p142) target = $region12
      $region11: #{tpu_custom_call.1} parent=5 // pred_region
        %s146 = ssub.s32 %s17, 1
        // Predicated region
        $region13: #{tpu_custom_call.1} parent=11 // pred_check
          %p147 = pneg %p64
        $region14: #{tpu_custom_call.1} parent=11 // pred_check_branch
          %149 = sbr.rel (%p147) target = $region16
        $region15: #{tpu_custom_call.1} parent=11 // pred_region
          %s151 = ssub.s32 1024, 1024
          %152 = vsyncadd [#allocation6], %s151
          %s153 = sshll.u32 [#allocation5], 4
          %s154 = int_to_ptr.vmem [resolvable:$true] %s153
          %159 = dma.hbm_to_vmem [thread:$0]  %s1, 1024, %s154, [#allocation6], 64, 64, 4
        $region16: #{tpu_custom_call.1} parent=11 // pred_fallthru
          _
        // Predicated region
        $region17: #{tpu_custom_call.1} parent=11 // pred_check
          %p160 = pneg %p85
        $region18: #{tpu_custom_call.1} parent=11 // pred_check_branch
          %162 = sbr.rel (%p160) target = $region20
        $region19: #{tpu_custom_call.1} parent=11 // pred_region
          %s164 = ssub.s32 1024, 1024
          %165 = vsyncadd [#allocation6], %s164
          %s166 = sshll.u32 [#allocation7], 4
          %s167 = int_to_ptr.vmem [resolvable:$true] %s166
          %172 = dma.hbm_to_vmem [thread:$0]  %s2, 1024, %s167, [#allocation6], 64, 64, 4
        $region20: #{tpu_custom_call.1} parent=11 // pred_fallthru
          _
        // Predicated region
        $region21: #{tpu_custom_call.1} parent=11 // pred_check
          %p173 = pneg %p106
        $region22: #{tpu_custom_call.1} parent=11 // pred_check_branch
          %175 = sbr.rel (%p173) target = $region24
        $region23: #{tpu_custom_call.1} parent=11 // pred_region
          _
        $region24: #{tpu_custom_call.1} parent=11 // pred_fallthru
          _
      $region12: #{tpu_custom_call.1} parent=5 // pred_fallthru
        _
      %p176 = scmp.lt.s32.totalorder %s17, 2
      // Predicated region
      $region25: #{tpu_custom_call.1} parent=5 // pred_check
        %p177 = pneg %p176
      $region26: #{tpu_custom_call.1} parent=5 // pred_check_branch
        %179 = sbr.rel (%p177) target = $region28
      $region27: #{tpu_custom_call.1} parent=5 // pred_region
        // Predicated region
        $region29: #{tpu_custom_call.1} parent=27 // pred_check
          %p180 = pneg %p37
        $region30: #{tpu_custom_call.1} parent=27 // pred_check_branch
          %182 = sbr.rel (%p180) target = $region32
        $region31: #{tpu_custom_call.1} parent=27 // pred_region
          %s183 = sand.u32 %s27, 1
          %s184 = scalar_lea.sflag [#allocation3], %s183
          %s185 = sand.u32 %s27, 1
          %s186 = smul.addr %s185, 16
          %s187 = scalar_lea.vmem [#allocation2], %s186
          %s188 = smul.u32 2, %s17
          %s190 = ssub.s32 256, 256
          %191 = vsyncadd %s184, %s190
          %s192 = smul.addr %s188, 128
          %s193 = scalar_lea.hbm %s0, %s192
          %s194 = sshll.u32 %s187, 4
          %s195 = int_to_ptr.vmem [resolvable:$true] %s194
          %200 = dma.hbm_to_vmem [thread:$0]  %s193, 256, %s195, %s184, 128, 128, 8
        $region32: #{tpu_custom_call.1} parent=27 // pred_fallthru
          _
      $region28: #{tpu_custom_call.1} parent=5 // pred_fallthru
        _
      %p201 = scmp.le.s32.totalorder 1, %s17
      %p202 = scmp.lt.s32.totalorder %s17, 3
      %p203 = pnand %p201, %p202
      %p204 = pneg %p203
      // Predicated region
      $region33: #{tpu_custom_call.1} parent=5 // pred_check
        _
      $region34: #{tpu_custom_call.1} parent=5 // pred_check_branch
        %206 = sbr.rel (%p203) target = $region36
      $region35: #{tpu_custom_call.1} parent=5 // pred_region
        %s207 = ssub.s32 %s17, 1
        %s208 = sand.u32 %s30, 1
        %s209 = scalar_lea.sflag [#allocation3], %s208
        %s210 = sand.u32 %s30, 1
        %s211 = smul.addr %s210, 16
        %s212 = scalar_lea.vmem [#allocation2], %s211
        // Predicated region
        $region37: #{tpu_custom_call.1} parent=35 // pred_check
          %p213 = pneg %p43
        $region38: #{tpu_custom_call.1} parent=35 // pred_check_branch
          %215 = sbr.rel (%p213) target = $region40
        $region39: #{tpu_custom_call.1} parent=35 // pred_region
          %216 = dma.done %s209, 256
        $region40: #{tpu_custom_call.1} parent=35 // pred_fallthru
          _
        // Predicated region
        $region41: #{tpu_custom_call.1} parent=35 // pred_check
          %p217 = pneg %p64
        $region42: #{tpu_custom_call.1} parent=35 // pred_check_branch
          %219 = sbr.rel (%p217) target = $region44
        $region43: #{tpu_custom_call.1} parent=35 // pred_region
          %220 = dma.done [#allocation6], 1024
        $region44: #{tpu_custom_call.1} parent=35 // pred_fallthru
          _
        // Predicated region
        $region45: #{tpu_custom_call.1} parent=35 // pred_check
          %p221 = pneg %p85
        $region46: #{tpu_custom_call.1} parent=35 // pred_check_branch
          %223 = sbr.rel (%p221) target = $region48
        $region47: #{tpu_custom_call.1} parent=35 // pred_region
          %224 = dma.done [#allocation6], 1024
        $region48: #{tpu_custom_call.1} parent=35 // pred_fallthru
          _
        %s225 = sand.u32 %s30, 1
        %s226 = scalar_lea.sflag [#allocation3], %s225
        %s227 = sand.u32 %s30, 1
        %s228 = smul.addr %s227, 16
        %s229 = scalar_lea.vmem [#allocation2], %s228
        %p230 = pneg %p43
        %p231 = pneg %p40
        %p232 = pneg %p64
        %p233 = pneg %p61
        %p234 = pneg %p85
        %p235 = pneg %p82
        %p236 = pneg %p106
        %p237 = pneg %p103
        %p238 = pneg %p132
        %p239 = pneg %p129
        %s240 = sand.u32 %s119, 1
        %s241 = scalar_lea.sflag [#allocation4], %s240
        %s242 = sand.u32 %s119, 1
        %s243 = smul.addr %s242, 16
        %s244 = scalar_lea.vmem [#allocation8], %s243
        %s245 = smul.u32 2, %s22
        %s246 = smul.u32 2, %s22
        %v248 = vld [vmem:[%s212] sm:$0xff]
        %v249 = vld [vmem:[%s212 + $0x8] sm:$0xff]
        %v250 = vld [vmem:[#allocation5] sm:$0xf]
        %v251 = vld [vmem:[#allocation5 + $0x4] sm:$0xf]
        %v252 = vld [vmem:[#allocation5 + $0x8] sm:$0xf]
        %v253 = vld [vmem:[#allocation5 + $0xc] sm:$0xf]
        %v254 = vld [vmem:[#allocation5 + $0x10] sm:$0xf]
        %v255 = vld [vmem:[#allocation5 + $0x14] sm:$0xf]
        %v256 = vld [vmem:[#allocation5 + $0x18] sm:$0xf]
        %v257 = vld [vmem:[#allocation5 + $0x1c] sm:$0xf]
        %v258 = vld [vmem:[#allocation5 + $0x20] sm:$0xf]
        %v259 = vld [vmem:[#allocation5 + $0x24] sm:$0xf]
        %v260 = vld [vmem:[#allocation5 + $0x28] sm:$0xf]
        %v261 = vld [vmem:[#allocation5 + $0x2c] sm:$0xf]
        %v262 = vld [vmem:[#allocation5 + $0x30] sm:$0xf]
        %v263 = vld [vmem:[#allocation5 + $0x34] sm:$0xf]
        %v264 = vld [vmem:[#allocation5 + $0x38] sm:$0xf]
        %v265 = vld [vmem:[#allocation5 + $0x3c] sm:$0xf]
        %v266 = vld [vmem:[#allocation7] sm:$0xf]
        %v267 = vld [vmem:[#allocation7 + $0x4] sm:$0xf]
        %v268 = vld [vmem:[#allocation7 + $0x8] sm:$0xf]
        %v269 = vld [vmem:[#allocation7 + $0xc] sm:$0xf]
        %v270 = vld [vmem:[#allocation7 + $0x10] sm:$0xf]
        %v271 = vld [vmem:[#allocation7 + $0x14] sm:$0xf]
        %v272 = vld [vmem:[#allocation7 + $0x18] sm:$0xf]
        %v273 = vld [vmem:[#allocation7 + $0x1c] sm:$0xf]
        %v274 = vld [vmem:[#allocation7 + $0x20] sm:$0xf]
        %v275 = vld [vmem:[#allocation7 + $0x24] sm:$0xf]
        %v276 = vld [vmem:[#allocation7 + $0x28] sm:$0xf]
        %v277 = vld [vmem:[#allocation7 + $0x2c] sm:$0xf]
        %v278 = vld [vmem:[#allocation7 + $0x30] sm:$0xf]
        %v279 = vld [vmem:[#allocation7 + $0x34] sm:$0xf]
        %v280 = vld [vmem:[#allocation7 + $0x38] sm:$0xf]
        %v281 = vld [vmem:[#allocation7 + $0x3c] sm:$0xf]
        %v282 = vld [vmem:[%s3] sm:$0x1]
        %v283 = vpack.c.bf16 %v249, %v248
        %v285 = vlaneseq
        %v286 = vshrl.u32 %v285, 7
        %v287 = vsub.s32 0, %v286
        %v288 = vrot.slane %v282, %v287
        %v306 = vunpack.c.l.b16 %v250
        %v307 = vunpack.c.l.b16 %v251
        %v308 = vunpack.c.l.b16 %v252
        %v309 = vunpack.c.l.b16 %v253
        %v310 = vunpack.c.l.b16 %v254
        %v311 = vunpack.c.l.b16 %v255
        %v312 = vunpack.c.l.b16 %v256
        %v313 = vunpack.c.l.b16 %v257
        %v314 = vunpack.c.l.b16 %v258
        %v315 = vunpack.c.l.b16 %v259
        %v316 = vunpack.c.l.b16 %v260
        %v317 = vunpack.c.l.b16 %v261
        %v318 = vunpack.c.l.b16 %v262
        %v319 = vunpack.c.l.b16 %v263
        %v320 = vunpack.c.l.b16 %v264
        %v321 = vunpack.c.l.b16 %v265
        %v322 = vpack.c.b16 %v307, %v306
        %v323 = vpack.c.b16 %v309, %v308
        %v324 = vpack.c.b16 %v311, %v310
        %v325 = vpack.c.b16 %v313, %v312
        %v326 = vpack.c.b16 %v315, %v314
        %v327 = vpack.c.b16 %v317, %v316
        %v328 = vpack.c.b16 %v319, %v318
        %v329 = vpack.c.b16 %v321, %v320
        %338 = vmatprep.subr.bf16.mxu0 0
        %339 = vmatpush1.bf16.xpose.msra.mxu0 %v322
        %340 = vmatprep.subr.bf16.mxu0 0
        %341 = vmatpush1.bf16.xpose.msra.mxu0 %v323
        %342 = vmatprep.subr.bf16.mxu0 0
        %343 = vmatpush1.bf16.xpose.msra.mxu0 %v324
        %344 = vmatprep.subr.bf16.mxu0 0
        %345 = vmatpush1.bf16.xpose.msra.mxu0 %v325
        %346 = vmatprep.subr.bf16.mxu0 0
        %347 = vmatpush1.bf16.xpose.msra.mxu0 %v326
        %348 = vmatprep.subr.bf16.mxu0 0
        %349 = vmatpush1.bf16.xpose.msra.mxu0 %v327
        %350 = vmatprep.subr.bf16.mxu0 0
        %351 = vmatpush1.bf16.xpose.msra.mxu0 %v328
        %352 = vmatprep.subr.bf16.mxu0 0
        %353 = vmatpush1.bf16.xpose.msra.mxu0 %v329
        %354 = vmatprep.subr.bf16.mxu0 0
        %355 = vmatpush1.bf16.xpose.msra.mxu0 0
        %356 = vmatprep.subr.bf16.mxu0 0
        %357 = vmatpush1.bf16.xpose.msra.mxu0 0
        %358 = vmatprep.subr.bf16.mxu0 0
        %359 = vmatpush1.bf16.xpose.msra.mxu0 0
        %360 = vmatprep.subr.bf16.mxu0 0
        %361 = vmatpush1.bf16.xpose.msra.mxu0 0
        %362 = vmatprep.subr.bf16.mxu0 0
        %363 = vmatpush1.bf16.xpose.msra.mxu0 0
        %364 = vmatprep.subr.bf16.mxu0 0
        %365 = vmatpush1.bf16.xpose.msra.mxu0 0
        %366 = vmatprep.subr.bf16.mxu0 0
        %367 = vmatpush1.bf16.xpose.msra.mxu0 0
        %368 = vmatprep.subr.bf16.mxu0 0
        %369 = vmatpush1.bf16.xpose.msra.mxu0 0
        %370 = vmatprep.mubr.bf16.mxu0 0
        %371 = vmatmul.mubr.bf16.gmra.mrb[0].mxu0 %v283
        %v372 = vpop.f32.mrb[0].mxu0
        %v373 = vadd.f32 %v288, %v372
        %v374 = vpop.f32.mrb[0].mxu0
        %v375 = vpop.f32.mrb[0].mxu0
        %v376 = vadd.f32 %v288, %v375
        %v377 = vpop.f32.mrb[0].mxu0
        %378 = vdwg.mxu0
        %379 = vmax.xlane.f32.xlu0 %v373
        %v380 = vpop.xlane.xlu0 %379
        %381 = vmax.xlane.f32.xlu0 %v376
        %v382 = vpop.xlane.xlu0 %381
        %v383 = vsub.f32 %v373, %v380
        %v384 = vsub.f32 %v376, %v382
        %v385 = vmul.f32 %v383, 1.442695
        %v386 = vpow.pop %v385
        %v387 = vmul.f32 %v384, 1.442695
        %v388 = vpow.pop %v387
        %389 = vadd.xlane.f32.xlu0 %v386
        %v390 = vpop.xlane.xlu0 %389
        %391 = vadd.xlane.f32.xlu0 %v388
        %v392 = vpop.xlane.xlu0 %391
        %v393 = vrcp.pop %v390
        %v394 = vmul.f32 %v386, %v393
        %v395 = vrcp.pop %v392
        %v396 = vmul.f32 %v388, %v395
        %398 = vset.pattern.permute.xlu0 0
        %399 = vperm.xlu0 %398, %v394
        %v400 = vpop.permute.xlu0 %399
        %403 = vset.pattern.permute.xlu0 0
        %404 = vperm.xlu0 %403, %v396
        %v405 = vpop.permute.xlu0 %404
        %v407 = vmul.f32 %v400, %v248
        %v408 = vmul.f32 %v405, %v249
        %v409 = vpack.c.bf16 %v396, %v394
        %v426 = vunpack.c.l.b16 %v266
        %v427 = vunpack.c.l.b16 %v267
        %v428 = vunpack.c.l.b16 %v268
        %v429 = vunpack.c.l.b16 %v269
        %v430 = vunpack.c.l.b16 %v270
        %v431 = vunpack.c.l.b16 %v271
        %v432 = vunpack.c.l.b16 %v272
        %v433 = vunpack.c.l.b16 %v273
        %v434 = vunpack.c.l.b16 %v274
        %v435 = vunpack.c.l.b16 %v275
        %v436 = vunpack.c.l.b16 %v276
        %v437 = vunpack.c.l.b16 %v277
        %v438 = vunpack.c.l.b16 %v278
        %v439 = vunpack.c.l.b16 %v279
        %v440 = vunpack.c.l.b16 %v280
        %v441 = vunpack.c.l.b16 %v281
        %v442 = vpack.c.b16 %v427, %v426
        %v443 = vpack.c.b16 %v429, %v428
        %v444 = vpack.c.b16 %v431, %v430
        %v445 = vpack.c.b16 %v433, %v432
        %v446 = vpack.c.b16 %v435, %v434
        %v447 = vpack.c.b16 %v437, %v436
        %v448 = vpack.c.b16 %v439, %v438
        %v449 = vpack.c.b16 %v441, %v440
        %458 = vmatprep.subr.bf16.mxu0 0
        %459 = vmatpush1.bf16.msra.mxu0 %v442
        %460 = vmatprep.subr.bf16.mxu0 0
        %461 = vmatpush1.bf16.msra.mxu0 %v443
        %462 = vmatprep.subr.bf16.mxu0 0
        %463 = vmatpush1.bf16.msra.mxu0 %v444
        %464 = vmatprep.subr.bf16.mxu0 0
        %465 = vmatpush1.bf16.msra.mxu0 %v445
        %466 = vmatprep.subr.bf16.mxu0 0
        %467 = vmatpush1.bf16.msra.mxu0 %v446
        %468 = vmatprep.subr.bf16.mxu0 0
        %469 = vmatpush1.bf16.msra.mxu0 %v447
        %470 = vmatprep.subr.bf16.mxu0 0
        %471 = vmatpush1.bf16.msra.mxu0 %v448
        %472 = vmatprep.subr.bf16.mxu0 0
        %473 = vmatpush1.bf16.msra.mxu0 %v449
        %474 = vmatprep.subr.bf16.mxu0 0
        %475 = vmatpush1.bf16.msra.mxu0 0
        %476 = vmatprep.subr.bf16.mxu0 0
        %477 = vmatpush1.bf16.msra.mxu0 0
        %478 = vmatprep.subr.bf16.mxu0 0
        %479 = vmatpush1.bf16.msra.mxu0 0
        %480 = vmatprep.subr.bf16.mxu0 0
        %481 = vmatpush1.bf16.msra.mxu0 0
        %482 = vmatprep.subr.bf16.mxu0 0
        %483 = vmatpush1.bf16.msra.mxu0 0
        %484 = vmatprep.subr.bf16.mxu0 0
        %485 = vmatpush1.bf16.msra.mxu0 0
        %486 = vmatprep.subr.bf16.mxu0 0
        %487 = vmatpush1.bf16.msra.mxu0 0
        %488 = vmatprep.subr.bf16.mxu0 0
        %489 = vmatpush1.bf16.msra.mxu0 0
        %490 = vmatprep.mubr.bf16.mxu0 0
        %491 = vmatmul.mubr.bf16.gmra.mrb[0].mxu0 %v409
        %v492 = vpop.f32.mrb[0].mxu0
        %v493 = vadd.f32 0.0, %v492
        %v494 = vpop.f32.mrb[0].mxu0
        %v495 = vpop.f32.mrb[0].mxu0
        %v496 = vadd.f32 0.0, %v495
        %v497 = vpop.f32.mrb[0].mxu0
        %498 = vdwg.mxu0
        %v499 = vadd.f32 %v407, %v493
        %v500 = vadd.f32 %v408, %v496
        %501 = vst [vmem:[%s244] sm:$0xff] %v499
        %502 = vst [vmem:[%s244 + $0x8] sm:$0xff] %v500
        %s503 = sand.u32 %s119, 1
        %s504 = scalar_lea.sflag [#allocation4], %s503
        %s505 = sand.u32 %s119, 1
        %s506 = smul.addr %s505, 16
        %s507 = scalar_lea.vmem [#allocation8], %s506
        // Predicated region
        $region49: #{tpu_custom_call.1} parent=35 // pred_check
          %p508 = pneg %p129
        $region50: #{tpu_custom_call.1} parent=35 // pred_check_branch
          %510 = sbr.rel (%p508) target = $region52
        $region51: #{tpu_custom_call.1} parent=35 // pred_region
          %s511 = smul.u32 2, %s22
          %s513 = ssub.s32 256, 256
          %514 = vsyncadd %s504, %s513
          %s515 = smul.addr %s511, 128
          %s516 = scalar_lea.hbm %s4, %s515
          %s517 = sshll.u32 %s507, 4
          %s518 = int_to_ptr.vmem [resolvable:$true] %s517
          %523 = dma.vmem_to_hbm [thread:$0]  %s518, 256, %s516, %s504, 128, 128, 8
        $region52: #{tpu_custom_call.1} parent=35 // pred_fallthru
          _
      $region36: #{tpu_custom_call.1} parent=5 // pred_fallthru
        _
      %p524 = scmp.le.s32.totalorder 2, %s17
      // Predicated region
      $region53: #{tpu_custom_call.1} parent=5 // pred_check
        %p525 = pneg %p524
      $region54: #{tpu_custom_call.1} parent=5 // pred_check_branch
        %527 = sbr.rel (%p525) target = $region56
      $region55: #{tpu_custom_call.1} parent=5 // pred_region
        %s528 = ssub.s32 %s17, 2
        // Predicated region
        $region57: #{tpu_custom_call.1} parent=55 // pred_check
          %p529 = pneg %p135
        $region58: #{tpu_custom_call.1} parent=55 // pred_check_branch
          %531 = sbr.rel (%p529) target = $region60
        $region59: #{tpu_custom_call.1} parent=55 // pred_region
          %s532 = sand.u32 %s120, 1
          %s533 = scalar_lea.sflag [#allocation4], %s532
          %s534 = sand.u32 %s120, 1
          %s535 = smul.addr %s534, 16
          %s536 = scalar_lea.vmem [#allocation8], %s535
          %537 = dma.done %s533, 256
        $region60: #{tpu_custom_call.1} parent=55 // pred_fallthru
          _
      $region56: #{tpu_custom_call.1} parent=5 // pred_fallthru
        _
    $region6: #{tpu_custom_call.1} parent=1 // loop_footer
      %s21 = sadd.s32 1, %s17
    $region7: #{tpu_custom_call.1} parent=1 // loop_footer_branch
      %16 = sbr.rel target = $region3
    $region8: #{tpu_custom_call.1} parent=1 // loop_exit
      _
    %538 = vsyncpa [#allocation3], 1
    %s539 = scalar_lea.sflag [#allocation3], 1
    %540 = vsyncpa %s539, 1
    %541 = vsyncpa [#allocation6], 1
    %542 = vsyncpa [#allocation4], 1
    %s543 = scalar_lea.sflag [#allocation4], 1
    %544 = vsyncpa %s543, 1

</llo_original>
